<compile_context>
chip_gen: v7x
topology: tpu7x:2x2x1
jax: 0.10.0
libtpu: 0.0.40
codegen_flags: <defaults>
</compile_context>

<pallas_src>
import functools

import jax
import jax.numpy as jnp
import numpy as np
from jax.experimental import pallas as pl
from jax.experimental.pallas import tpu as pltpu

NEG_SLOPE = 0.2      # GATConv default LeakyReLU negative slope
NEG_INF = -1e30      # additive mask sentinel (f32/bf16 safe)


def _round_up(x, m):
    return (x + m - 1) // m * m


# --------------------------------------------------------------------------------------
# Kernel 1: node-feature projection (hoisted out of the dst-tiled attention loop).
# --------------------------------------------------------------------------------------
def proj_kernel(x_ref, w_ref, aproj_ref, xlin_ref, a_ref):
    """x_lin = x @ W.T ; a = x_lin @ [Asrc | Adst]  for one tile of node rows."""
    xl = jnp.dot(x_ref[...], w_ref[...], preferred_element_type=jnp.float32)   # [T, H*C]
    xl_bf16 = xl.astype(jnp.bfloat16)
    xlin_ref[...] = xl_bf16
    a_ref[...] = jnp.dot(xl_bf16, aproj_ref[...],
                         preferred_element_type=jnp.float32)                    # [T, 2H]


# --------------------------------------------------------------------------------------
# Kernel 2: per dst-row tile, masked softmax over all sources + aggregation (all heads).
# --------------------------------------------------------------------------------------
def attn_kernel(xlin_ref, a_src_t_ref, a_dst_ref, maskb_ref, bias_ref, out_ref,
                *, heads, out_channels):
    xlin = xlin_ref[...]                                   # [N_pad, H*C] bf16 (resident)
    a_src_t = a_src_t_ref[...]                             # [H, N_pad]  f32  (resident)
    a_dst = a_dst_ref[...]                                 # [T, H]      f32
    mask_bias = maskb_ref[...].astype(jnp.float32)         # [T, N_pad]  (one cast per tile)

    C = out_channels
    outs = []
    for h in range(heads):                                 # static unroll (heads is small)
        logits = a_dst[:, h:h + 1] + a_src_t[h:h + 1, :]                 # [T, N_pad]
        logits = jnp.where(logits > 0, logits, NEG_SLOPE * logits)       # LeakyReLU
        logits = logits + mask_bias                                       # additive -inf mask
        m = jnp.max(logits, axis=-1, keepdims=True)
        p = jnp.exp(logits - m)
        s = jnp.sum(p, axis=-1, keepdims=True)
        num = jnp.dot(p.astype(jnp.bfloat16), xlin[:, h * C:(h + 1) * C],
                      preferred_element_type=jnp.float32)                 # [T, C]
        outs.append(num * pl.reciprocal(s, approx=True))                  # post-matmul norm
    # Single lane-dense store of all concatenated heads + one bias add.
    out_ref[...] = jnp.concatenate(outs, axis=-1) + bias_ref[...]


# --------------------------------------------------------------------------------------
# Wrapper: forward of KGATLayer -> {'entity': [N, heads*out_channels]}
# --------------------------------------------------------------------------------------
def kgat_layer_forward(x_dict, edge_index_dict, params, *, heads, out_channels,
                       tile_dst=128):
    # tile_dst=128 is safe for v7x's 64 MiB VMEM; on v6e/v5e it can be raised to 256-512.
    x = x_dict["entity"]
    edge_index = edge_index_dict[("entity", "relates_to", "entity")]
    N, Fin = x.shape
    H, C = heads, out_channels
    HC = H * C

    # ---- parameter prep (host/XLA side) -------------------------------------------
    W_t = params["lin_weight"].T.astype(jnp.bfloat16)                    # [Fin, H*C]
    att_src, att_dst = params["att_src"], params["att_dst"]              # [H, C] each
    bias = params["bias"].reshape(1, HC).astype(jnp.float32)             # [1, H*C]

    # Fused block-diagonal attention projection [HC, 2H]: cols [0,H)->a_src, [H,2H)->a_dst.
    A = jnp.zeros((HC, 2 * H), jnp.float32)
    for h in range(H):
        A = A.at[h * C:(h + 1) * C, h].set(att_src[h])
        A = A.at[h * C:(h + 1) * C, H + h].set(att_dst[h])
    A = A.astype(jnp.bfloat16)

    # ---- pad node axis to a multiple of the tile (and 128 lanes) --------------------
    N_pad = _round_up(max(N, tile_dst), tile_dst)
    x_pad = jnp.zeros((N_pad, Fin), jnp.bfloat16).at[:N].set(x.astype(jnp.bfloat16))

    # Dense additive attention mask: 0 for edges / self loops, -1e30 otherwise
    # (including padded src columns). Stored in bf16 to halve the N^2 HBM stream.
    src, dst = edge_index[0], edge_index[1]
    adj = jnp.zeros((N_pad, N_pad), jnp.bool_).at[dst, src].set(True)
    idx = jnp.arange(N)
    adj = adj.at[idx, idx].set(True)                     # self loops for real nodes only
    mask_bias = jnp.where(adj, 0.0, NEG_INF).astype(jnp.bfloat16)

    n_row_tiles = N_pad // tile_dst
    cparams = pltpu.CompilerParams(
        dimension_semantics=("parallel",),               # megacore-shardable on v7x
        vmem_limit_bytes=48 * 1024 * 1024)

    # ---- kernel 1: projection (done once, tiled over node rows) ---------------------
    xlin, a = pl.pallas_call(
        proj_kernel,
        grid=(n_row_tiles,),
        in_specs=[pl.BlockSpec((tile_dst, Fin), lambda i: (i, 0)),
                  pl.BlockSpec((Fin, HC), lambda i: (0, 0)),          # W resident
                  pl.BlockSpec((HC, 2 * H), lambda i: (0, 0))],       # [Asrc|Adst] resident
        out_specs=(pl.BlockSpec((tile_dst, HC), lambda i: (i, 0)),
                   pl.BlockSpec((tile_dst, 2 * H), lambda i: (i, 0))),
        out_shape=(jax.ShapeDtypeStruct((N_pad, HC), jnp.bfloat16),
                   jax.ShapeDtypeStruct((N_pad, 2 * H), jnp.float32)),
        compiler_params=cparams,
    )(x_pad, W_t, A)

    a_src_t = a[:, :H].T                                  # [H, N_pad] (one transpose, outside)
    a_dst = a[:, H:]                                      # [N_pad, H]

    # ---- kernel 2: dst-tiled attention + aggregation --------------------------------
    cost = pl.CostEstimate(
        flops=int(2 * N_pad * N_pad * HC + 6 * H * N_pad * N_pad),
        transcendentals=int(H * N_pad * N_pad),
        bytes_accessed=int(mask_bias.size * 2 + xlin.size * 2 + N_pad * HC * 4))

    out_pad = pl.pallas_call(
        functools.partial(attn_kernel, heads=H, out_channels=C),
        grid=(n_row_tiles,),
        in_specs=[pl.BlockSpec((N_pad, HC), lambda i: (0, 0)),          # x_lin, resident
                  pl.BlockSpec((H, N_pad), lambda i: (0, 0)),           # a_src^T, resident
                  pl.BlockSpec((tile_dst, H), lambda i: (i, 0)),        # a_dst tile
                  pl.BlockSpec((tile_dst, N_pad), lambda i: (i, 0)),    # mask tile (pipelined)
                  pl.BlockSpec((1, HC), lambda i: (0, 0))],             # bias, resident
        out_specs=pl.BlockSpec((tile_dst, HC), lambda i: (i, 0)),
        out_shape=jax.ShapeDtypeStruct((N_pad, HC), jnp.float32),
        compiler_params=cparams,
        cost_estimate=cost,
    )(xlin, a_src_t, a_dst, mask_bias, bias)

    return {"entity": out_pad[:N]}


# --------------------------------------------------------------------------------------
# Pure-JAX dense reference (f32) for sanity checking.
# --------------------------------------------------------------------------------------
def reference_forward(x, mask, W_t, att_src, att_dst, bias, heads, out_channels):
    N = x.shape[0]
    x_lin = (x @ W_t).reshape(N, heads, out_channels)
    a_src = jnp.einsum("nhc,hc->nh", x_lin, att_src)
    a_dst = jnp.einsum("nhc,hc->nh", x_lin, att_dst)
    logits = a_dst[:, None, :] + a_src[None, :, :]                       # [dst, src, h]
    logits = jnp.where(logits > 0, logits, NEG_SLOPE * logits)
    logits = jnp.where(mask[:, :, None] > 0, logits, NEG_INF)
    logits = logits - jnp.max(logits, axis=1, keepdims=True)
    p = jnp.exp(logits)
    attn = p / jnp.sum(p, axis=1, keepdims=True)
    out = jnp.einsum("ijh,jhc->ihc", attn, x_lin).reshape(N, heads * out_channels)
    return out + bias[None, :]


if __name__ == "__main__":
    # Small deterministic problem: N entities with Fin features, heads=4, out_channels=32.
    N, Fin = 16, 32
    heads, out_channels = 4, 32
    HC = heads * out_channels
    E = 40

    key = jax.random.PRNGKey(0)
    k_x, k_w, k_as, k_ad, k_e = jax.random.split(key, 5)

    x = jax.random.normal(k_x, (N, Fin), jnp.float32)

    # Deterministic parameter init (glorot-style scaling), bias zeros.
    lin_weight = jax.random.normal(k_w, (HC, Fin), jnp.float32) * (2.0 / (Fin + HC)) ** 0.5
    att_src = jax.random.normal(k_as, (heads, out_channels), jnp.float32) * 0.1
    att_dst = jax.random.normal(k_ad, (heads, out_channels), jnp.float32) * 0.1
    bias = jnp.zeros((HC,), jnp.float32)
    params = {"lin_weight": lin_weight, "att_src": att_src, "att_dst": att_dst, "bias": bias}

    # Random (deterministic) edge index for ('entity','relates_to','entity').
    edges = jax.random.randint(k_e, (2, E), 0, N, jnp.int32)
    x_dict = {"entity": x}
    edge_index_dict = {("entity", "relates_to", "entity"): edges}

    h_dict = kgat_layer_forward(x_dict, edge_index_dict, params,
                                heads=heads, out_channels=out_channels)
    out = jax.block_until_ready(h_dict["entity"])
    assert out.shape == (N, HC)

    # Sanity check against a pure-JAX f32 dense reference (kernel uses bf16 matmuls,
    # so tolerances are modest).
    src, dst = edges[0], edges[1]
    mask = jnp.zeros((N, N), jnp.float32).at[dst, src].set(1.0)
    mask = mask.at[jnp.arange(N), jnp.arange(N)].set(1.0)
    ref = reference_forward(x, mask, lin_weight.T, att_src, att_dst, bias,
                            heads, out_channels)
    np.testing.assert_allclose(np.asarray(out), np.asarray(ref), rtol=2e-2, atol=2e-2)

    print("KERNEL_OK")
</pallas_src>

<mosaic_0001>
module attributes {stable_mosaic.version = 11 : i64} {
  func.func @proj_kernel(%arg0: i32, %arg1: memref<128x32xbf16, #tpu.memory_space<vmem>>, %arg2: memref<32x128xbf16, #tpu.memory_space<vmem>>, %arg3: memref<128x8xbf16, #tpu.memory_space<vmem>>, %arg4: memref<128x128xbf16, #tpu.memory_space<vmem>>, %arg5: memref<128x8xf32, #tpu.memory_space<vmem>>) attributes {dimension_semantics = [#tpu.dimension_semantics<parallel>], iteration_bounds = array<i64: 1>, scalar_prefetch = 0 : i64, scratch_operands = 0 : i64, tpu.core_type = #tpu.core_type<tc>, window_params = [{transform_indices = @transform_0, window_bounds = array<i64: 128, 32>}, {pipeline_mode = #tpu.pipeline_mode<synchronous>, transform_indices = @transform_1, window_bounds = array<i64: 32, 128>}, {pipeline_mode = #tpu.pipeline_mode<synchronous>, transform_indices = @transform_2, window_bounds = array<i64: 128, 8>}, {transform_indices = @transform_3, window_bounds = array<i64: 128, 128>}, {transform_indices = @transform_4, window_bounds = array<i64: 128, 8>}]} {
    %c0 = arith.constant 0 : index
    %c0_0 = arith.constant 0 : index
    %0 = vector.load %arg1[%c0, %c0_0] : memref<128x32xbf16, #tpu.memory_space<vmem>>, vector<128x32xbf16>
    %c0_1 = arith.constant 0 : index
    %c0_2 = arith.constant 0 : index
    %1 = vector.load %arg2[%c0_1, %c0_2] : memref<32x128xbf16, #tpu.memory_space<vmem>>, vector<32x128xbf16>
    %cst = arith.constant dense<0.000000e+00> : vector<128x128xf32>
    %2 = tpu.matmul %0, %1, %cst {dimension_numbers = #tpu.dot_dimension_numbers<[1], [0], [0], [1], [0, 0, 1, 1], [], []>} : vector<128x32xbf16>, vector<32x128xbf16>, vector<128x128xf32> -> vector<128x128xf32>
    %3 = arith.truncf %2 : vector<128x128xf32> to vector<128x128xbf16>
    %c0_3 = arith.constant 0 : index
    %c0_4 = arith.constant 0 : index
    %4 = vector.load %arg4[%c0_3, %c0_4] : memref<128x128xbf16, #tpu.memory_space<vmem>>, vector<128x128xbf16>
    tpu.vector_store %arg4[%c0_3, %c0_4], %3 {strides = array<i32>} : memref<128x128xbf16, #tpu.memory_space<vmem>>, vector<128x128xbf16>,
    %c0_5 = arith.constant 0 : index
    %c0_6 = arith.constant 0 : index
    %5 = vector.load %arg3[%c0_5, %c0_6] : memref<128x8xbf16, #tpu.memory_space<vmem>>, vector<128x8xbf16>
    %cst_7 = arith.constant dense<0.000000e+00> : vector<128x8xf32>
    %6 = tpu.matmul %3, %5, %cst_7 {dimension_numbers = #tpu.dot_dimension_numbers<[1], [0], [0], [1], [0, 0, 1, 1], [], []>} : vector<128x128xbf16>, vector<128x8xbf16>, vector<128x8xf32> -> vector<128x8xf32>
    %c0_8 = arith.constant 0 : index
    %c0_9 = arith.constant 0 : index
    %7 = vector.load %arg5[%c0_8, %c0_9] : memref<128x8xf32, #tpu.memory_space<vmem>>, vector<128x8xf32>
    tpu.vector_store %arg5[%c0_8, %c0_9], %6 {strides = array<i32>} : memref<128x8xf32, #tpu.memory_space<vmem>>, vector<128x8xf32>,
    return
  }
  func.func @transform_0(%arg0: i32) -> (i32, i32) {
    %c0_i32 = arith.constant 0 : i32
    %c0_i32_0 = arith.constant 0 : i32
    return %arg0, %c0_i32 : i32, i32
  }
  func.func @transform_1(%arg0: i32) -> (i32, i32) {
    %c0_i32 = arith.constant 0 : i32
    %c0_i32_0 = arith.constant 0 : i32
    %c0_i32_1 = arith.constant 0 : i32
    return %c0_i32, %c0_i32_0 : i32, i32
  }
  func.func @transform_2(%arg0: i32) -> (i32, i32) {
    %c0_i32 = arith.constant 0 : i32
    %c0_i32_0 = arith.constant 0 : i32
    %c0_i32_1 = arith.constant 0 : i32
    return %c0_i32, %c0_i32_0 : i32, i32
  }
  func.func @transform_3(%arg0: i32) -> (i32, i32) {
    %c0_i32 = arith.constant 0 : i32
    %c0_i32_0 = arith.constant 0 : i32
    return %arg0, %c0_i32 : i32, i32
  }
  func.func @transform_4(%arg0: i32) -> (i32, i32) {
    %c0_i32 = arith.constant 0 : i32
    %c0_i32_0 = arith.constant 0 : i32
    return %arg0, %c0_i32 : i32, i32
  }
}

</mosaic_0001>

<llo_original>
// kernel: tpu_custom_call.1
$region0: #{tpu_custom_call.1}
  #allocation0 [shape = 'u32[]', space=smem, size = 0x4, offset = 0x4, fixed_abs, tag = 'smem constant byte address 0x4 - core index']
  #allocation1 [shape = 'u32[144,128]{1,0:T(1,128)}', space=vmem, size = 0x12000, scoped, tag = 'internal scratch']
  %s0 = inlined_call_operand.vmem [shape: bf16[128,32], index: 0, kind: input, shape index: {}]
  %s1 = inlined_call_operand.vmem [shape: bf16[32,128], index: 1, kind: input, shape index: {}]
  %s2 = inlined_call_operand.vmem [shape: bf16[128,8], index: 2, kind: input, shape index: {}]
  %s3 = inlined_call_operand.hbm [shape: bf16[128,128], index: 3, kind: output, shape index: {0}]
  %s4 = inlined_call_operand.vmem [shape: f32[128,8], index: 4, kind: output, shape index: {1}]
  %5 = xla_tuple %s3, %s4
  %s6 = sld [smem:[#allocation0]]
  $region30: #{tpu_custom_call.1} parent=0
    _
  %s8 = ssub.s32 1, %s6
  %s9 = scalar_select 0, %s8, %s6
  $region1: #{tpu_custom_call.1} parent=0
    #allocation2 [shape = 'u8[32768]{0}', space=vmem, size = 0x8000, scoped, tag = 'output window, operand 0, single buffered']
    #allocation3 [shape = 's32[1]{0}', space=sflag, size = 0x4, scoped, tag = 'scoped memory for tpu_custom_call.1']
    %10 = vsyncpa [#allocation3], 0
    // Predicated region
    $region2: #{tpu_custom_call.1} parent=1 // pred_check
      _
    $region3: #{tpu_custom_call.1} parent=1 // pred_check_branch
      %12 = sbr.rel (0) target = $region5
    $region4: #{tpu_custom_call.1} parent=1 // pred_region
      _
    $region5: #{tpu_custom_call.1} parent=1 // pred_fallthru
      _
    // Predicated region
    $region6: #{tpu_custom_call.1} parent=1 // pred_check
      _
    $region7: #{tpu_custom_call.1} parent=1 // pred_check_branch
      %14 = sbr.rel (0) target = $region9
    $region8: #{tpu_custom_call.1} parent=1 // pred_region
      _
    $region9: #{tpu_custom_call.1} parent=1 // pred_fallthru
      _
    // Predicated region
    $region10: #{tpu_custom_call.1} parent=1 // pred_check
      _
    $region11: #{tpu_custom_call.1} parent=1 // pred_check_branch
      %16 = sbr.rel (0) target = $region13
    $region12: #{tpu_custom_call.1} parent=1 // pred_region
      _
    $region13: #{tpu_custom_call.1} parent=1 // pred_fallthru
      _
    %v18 = vld [vmem:[%s0] sm:$0xf]
    %v19 = vld [vmem:[%s0 + $0x4] sm:$0xf]
    %v20 = vld [vmem:[%s0 + $0x8] sm:$0xf]
    %v21 = vld [vmem:[%s0 + $0xc] sm:$0xf]
    %v22 = vld [vmem:[%s0 + $0x10] sm:$0xf]
    %v23 = vld [vmem:[%s0 + $0x14] sm:$0xf]
    %v24 = vld [vmem:[%s0 + $0x18] sm:$0xf]
    %v25 = vld [vmem:[%s0 + $0x1c] sm:$0xf]
    %v26 = vld [vmem:[%s0 + $0x20] sm:$0xf]
    %v27 = vld [vmem:[%s0 + $0x24] sm:$0xf]
    %v28 = vld [vmem:[%s0 + $0x28] sm:$0xf]
    %v29 = vld [vmem:[%s0 + $0x2c] sm:$0xf]
    %v30 = vld [vmem:[%s0 + $0x30] sm:$0xf]
    %v31 = vld [vmem:[%s0 + $0x34] sm:$0xf]
    %v32 = vld [vmem:[%s0 + $0x38] sm:$0xf]
    %v33 = vld [vmem:[%s0 + $0x3c] sm:$0xf]
    %v34 = vld [vmem:[%s1] sm:$0xf]
    %v35 = vld [vmem:[%s1 + $0x4] sm:$0xf]
    %v36 = vld [vmem:[%s1 + $0x8] sm:$0xf]
    %v37 = vld [vmem:[%s1 + $0xc] sm:$0xf]
    %v54 = vunpack.c.l.b16 %v18
    %v55 = vunpack.c.l.b16 %v19
    %v56 = vunpack.c.l.b16 %v20
    %v57 = vunpack.c.l.b16 %v21
    %v58 = vunpack.c.l.b16 %v22
    %v59 = vunpack.c.l.b16 %v23
    %v60 = vunpack.c.l.b16 %v24
    %v61 = vunpack.c.l.b16 %v25
    %v62 = vunpack.c.l.b16 %v26
    %v63 = vunpack.c.l.b16 %v27
    %v64 = vunpack.c.l.b16 %v28
    %v65 = vunpack.c.l.b16 %v29
    %v66 = vunpack.c.l.b16 %v30
    %v67 = vunpack.c.l.b16 %v31
    %v68 = vunpack.c.l.b16 %v32
    %v69 = vunpack.c.l.b16 %v33
    %v70 = vpack.c.b16 %v55, %v54
    %v71 = vpack.c.b16 %v57, %v56
    %v72 = vpack.c.b16 %v59, %v58
    %v73 = vpack.c.b16 %v61, %v60
    %v74 = vpack.c.b16 %v63, %v62
    %v75 = vpack.c.b16 %v65, %v64
    %v76 = vpack.c.b16 %v67, %v66
    %v77 = vpack.c.b16 %v69, %v68
    %v82 = vunpack.c.l.b16 %v34
    %v83 = vunpack.c.l.b16 %v35
    %v84 = vunpack.c.l.b16 %v36
    %v85 = vunpack.c.l.b16 %v37
    %v86 = vpack.c.b16 %v83, %v82
    %v87 = vpack.c.b16 %v85, %v84
    %vm90 = vcmask 261120
    %v92 = vsel %vm90, %v70, 0
    %v95 = vsel %vm90, %v71, 0
    %v98 = vsel %vm90, %v72, 0
    %v101 = vsel %vm90, %v73, 0
    %v104 = vsel %vm90, %v74, 0
    %v107 = vsel %vm90, %v75, 0
    %v110 = vsel %vm90, %v76, 0
    %v113 = vsel %vm90, %v77, 0
    %115 = vmatprep.subr.bf16.mxu0 0
    %116 = vmatpush1.bf16.msra.mxu0 %v86
    %117 = vmatprep.subr.bf16.mxu0 0
    %118 = vmatpush1.bf16.msra.mxu0 %v87
    %119 = vmatprep.subr.bf16.mxu0 0
    %120 = vmatpush1.bf16.msra.mxu0 0
    %121 = vmatprep.subr.bf16.mxu0 0
    %122 = vmatpush1.bf16.msra.mxu0 0
    %123 = vmatprep.subr.bf16.mxu0 0
    %124 = vmatpush1.bf16.msra.mxu0 0
    %125 = vmatprep.subr.bf16.mxu0 0
    %126 = vmatpush1.bf16.msra.mxu0 0
    %127 = vmatprep.subr.bf16.mxu0 0
    %128 = vmatpush1.bf16.msra.mxu0 0
    %129 = vmatprep.subr.bf16.mxu0 0
    %130 = vmatpush1.bf16.msra.mxu0 0
    %131 = vmatprep.subr.bf16.mxu0 0
    %132 = vmatpush1.bf16.msra.mxu0 0
    %133 = vmatprep.subr.bf16.mxu0 0
    %134 = vmatpush1.bf16.msra.mxu0 0
    %135 = vmatprep.subr.bf16.mxu0 0
    %136 = vmatpush1.bf16.msra.mxu0 0
    %137 = vmatprep.subr.bf16.mxu0 0
    %138 = vmatpush1.bf16.msra.mxu0 0
    %139 = vmatprep.subr.bf16.mxu0 0
    %140 = vmatpush1.bf16.msra.mxu0 0
    %141 = vmatprep.subr.bf16.mxu0 0
    %142 = vmatpush1.bf16.msra.mxu0 0
    %143 = vmatprep.subr.bf16.mxu0 0
    %144 = vmatpush1.bf16.msra.mxu0 0
    %145 = vmatprep.subr.bf16.mxu0 0
    %146 = vmatpush1.bf16.msra.mxu0 0
    %147 = vmatprep.mubr.bf16.mxu0 0
    %148 = vmatmul.mubr.bf16.gmra.mrb[0].mxu0 %v92
    %v149 = vpop.f32.mrb[0].mxu0
    %v150 = vadd.f32 0.0, %v149
    %v151 = vpop.f32.mrb[0].mxu0
    %v152 = vpop.f32.mrb[0].mxu0
    %v153 = vadd.f32 0.0, %v152
    %v154 = vpop.f32.mrb[0].mxu0
    %155 = vmatprep.mubr.bf16.mxu0 0
    %156 = vmatmul.mubr.bf16.gmra.mrb[0].mxu0 %v95
    %v157 = vpop.f32.mrb[0].mxu0
    %v158 = vadd.f32 0.0, %v157
    %v159 = vpop.f32.mrb[0].mxu0
    %v160 = vpop.f32.mrb[0].mxu0
    %v161 = vadd.f32 0.0, %v160
    %v162 = vpop.f32.mrb[0].mxu0
    %163 = vmatprep.mubr.bf16.mxu0 0
    %164 = vmatmul.mubr.bf16.gmra.mrb[0].mxu0 %v98
    %v165 = vpop.f32.mrb[0].mxu0
    %v166 = vadd.f32 0.0, %v165
    %v167 = vpop.f32.mrb[0].mxu0
    %v168 = vpop.f32.mrb[0].mxu0
    %v169 = vadd.f32 0.0, %v168
    %v170 = vpop.f32.mrb[0].mxu0
    %171 = vmatprep.mubr.bf16.mxu0 0
    %172 = vmatmul.mubr.bf16.gmra.mrb[0].mxu0 %v101
    %v173 = vpop.f32.mrb[0].mxu0
    %v174 = vadd.f32 0.0, %v173
    %v175 = vpop.f32.mrb[0].mxu0
    %v176 = vpop.f32.mrb[0].mxu0
    %v177 = vadd.f32 0.0, %v176
    %v178 = vpop.f32.mrb[0].mxu0
    %179 = vmatprep.mubr.bf16.mxu0 0
    %180 = vmatmul.mubr.bf16.gmra.mrb[0].mxu0 %v104
    %v181 = vpop.f32.mrb[0].mxu0
    %v182 = vadd.f32 0.0, %v181
    %v183 = vpop.f32.mrb[0].mxu0
    %v184 = vpop.f32.mrb[0].mxu0
    %v185 = vadd.f32 0.0, %v184
    %v186 = vpop.f32.mrb[0].mxu0
    %187 = vmatprep.mubr.bf16.mxu0 0
    %188 = vmatmul.mubr.bf16.gmra.mrb[0].mxu0 %v107
    %v189 = vpop.f32.mrb[0].mxu0
    %v190 = vadd.f32 0.0, %v189
    %v191 = vpop.f32.mrb[0].mxu0
    %v192 = vpop.f32.mrb[0].mxu0
    %v193 = vadd.f32 0.0, %v192
    %v194 = vpop.f32.mrb[0].mxu0
    %195 = vmatprep.mubr.bf16.mxu0 0
    %196 = vmatmul.mubr.bf16.gmra.mrb[0].mxu0 %v110
    %v197 = vpop.f32.mrb[0].mxu0
    %v198 = vadd.f32 0.0, %v197
    %v199 = vpop.f32.mrb[0].mxu0
    %v200 = vpop.f32.mrb[0].mxu0
    %v201 = vadd.f32 0.0, %v200
    %v202 = vpop.f32.mrb[0].mxu0
    %203 = vmatprep.mubr.bf16.mxu0 0
    %204 = vmatmul.mubr.bf16.gmra.mrb[0].mxu0 %v113
    %v205 = vpop.f32.mrb[0].mxu0
    %v206 = vadd.f32 0.0, %v205
    %v207 = vpop.f32.mrb[0].mxu0
    %v208 = vpop.f32.mrb[0].mxu0
    %v209 = vadd.f32 0.0, %v208
    %v210 = vpop.f32.mrb[0].mxu0
    %211 = vdwg.mxu0
    %v212 = vpack.c.bf16 %v153, %v150
    %v213 = vpack.c.bf16 %v161, %v158
    %v214 = vpack.c.bf16 %v169, %v166
    %v215 = vpack.c.bf16 %v177, %v174
    %v216 = vpack.c.bf16 %v185, %v182
    %v217 = vpack.c.bf16 %v193, %v190
    %v218 = vpack.c.bf16 %v201, %v198
    %v219 = vpack.c.bf16 %v209, %v206
    %v228 = vunpack.c.l.b16 %v212
    %v229 = vunpack.c.h.b16 %v212
    %v230 = vunpack.c.l.b16 %v213
    %v231 = vunpack.c.h.b16 %v213
    %v232 = vunpack.c.l.b16 %v214
    %v233 = vunpack.c.h.b16 %v214
    %v234 = vunpack.c.l.b16 %v215
    %v235 = vunpack.c.h.b16 %v215
    %v236 = vunpack.c.l.b16 %v216
    %v237 = vunpack.c.h.b16 %v216
    %v238 = vunpack.c.l.b16 %v217
    %v239 = vunpack.c.h.b16 %v217
    %v240 = vunpack.c.l.b16 %v218
    %v241 = vunpack.c.h.b16 %v218
    %v242 = vunpack.c.l.b16 %v219
    %v243 = vunpack.c.h.b16 %v219
    %v244 = vpack.c.b16 %v228, %v228
    %v245 = vpack.c.b16 %v229, %v229
    %v246 = vpack.c.b16 %v230, %v230
    %v247 = vpack.c.b16 %v231, %v231
    %v248 = vpack.c.b16 %v232, %v232
    %v249 = vpack.c.b16 %v233, %v233
    %v250 = vpack.c.b16 %v234, %v234
    %v251 = vpack.c.b16 %v235, %v235
    %v252 = vpack.c.b16 %v236, %v236
    %v253 = vpack.c.b16 %v237, %v237
    %v254 = vpack.c.b16 %v238, %v238
    %v255 = vpack.c.b16 %v239, %v239
    %v256 = vpack.c.b16 %v240, %v240
    %v257 = vpack.c.b16 %v241, %v241
    %v258 = vpack.c.b16 %v242, %v242
    %v259 = vpack.c.b16 %v243, %v243
    %276 = vst [vmem:[#allocation2] sm:$0xf] %v244
    %277 = vst [vmem:[#allocation2 + $0x4] sm:$0xf] %v245
    %278 = vst [vmem:[#allocation2 + $0x8] sm:$0xf] %v246
    %279 = vst [vmem:[#allocation2 + $0xc] sm:$0xf] %v247
    %280 = vst [vmem:[#allocation2 + $0x10] sm:$0xf] %v248
    %281 = vst [vmem:[#allocation2 + $0x14] sm:$0xf] %v249
    %282 = vst [vmem:[#allocation2 + $0x18] sm:$0xf] %v250
    %283 = vst [vmem:[#allocation2 + $0x1c] sm:$0xf] %v251
    %284 = vst [vmem:[#allocation2 + $0x20] sm:$0xf] %v252
    %285 = vst [vmem:[#allocation2 + $0x24] sm:$0xf] %v253
    %286 = vst [vmem:[#allocation2 + $0x28] sm:$0xf] %v254
    %287 = vst [vmem:[#allocation2 + $0x2c] sm:$0xf] %v255
    %288 = vst [vmem:[#allocation2 + $0x30] sm:$0xf] %v256
    %289 = vst [vmem:[#allocation2 + $0x34] sm:$0xf] %v257
    %290 = vst [vmem:[#allocation2 + $0x38] sm:$0xf] %v258
    %291 = vst [vmem:[#allocation2 + $0x3c] sm:$0xf] %v259
    %v292 = vld [vmem:[%s2] sm:$0xf]
    %v293 = vld [vmem:[%s2 + $0x4] sm:$0xf]
    %v294 = vld [vmem:[%s2 + $0x8] sm:$0xf]
    %v295 = vld [vmem:[%s2 + $0xc] sm:$0xf]
    %v296 = vld [vmem:[%s2 + $0x10] sm:$0xf]
    %v297 = vld [vmem:[%s2 + $0x14] sm:$0xf]
    %v298 = vld [vmem:[%s2 + $0x18] sm:$0xf]
    %v299 = vld [vmem:[%s2 + $0x1c] sm:$0xf]
    %v300 = vld [vmem:[%s2 + $0x20] sm:$0xf]
    %v301 = vld [vmem:[%s2 + $0x24] sm:$0xf]
    %v302 = vld [vmem:[%s2 + $0x28] sm:$0xf]
    %v303 = vld [vmem:[%s2 + $0x2c] sm:$0xf]
    %v304 = vld [vmem:[%s2 + $0x30] sm:$0xf]
    %v305 = vld [vmem:[%s2 + $0x34] sm:$0xf]
    %v306 = vld [vmem:[%s2 + $0x38] sm:$0xf]
    %v307 = vld [vmem:[%s2 + $0x3c] sm:$0xf]
    %v324 = vunpack.c.l.b16 %v292
    %v325 = vunpack.c.l.b16 %v293
    %v326 = vunpack.c.l.b16 %v294
    %v327 = vunpack.c.l.b16 %v295
    %v328 = vunpack.c.l.b16 %v296
    %v329 = vunpack.c.l.b16 %v297
    %v330 = vunpack.c.l.b16 %v298
    %v331 = vunpack.c.l.b16 %v299
    %v332 = vunpack.c.l.b16 %v300
    %v333 = vunpack.c.l.b16 %v301
    %v334 = vunpack.c.l.b16 %v302
    %v335 = vunpack.c.l.b16 %v303
    %v336 = vunpack.c.l.b16 %v304
    %v337 = vunpack.c.l.b16 %v305
    %v338 = vunpack.c.l.b16 %v306
    %v339 = vunpack.c.l.b16 %v307
    %v340 = vpack.c.b16 %v325, %v324
    %v341 = vpack.c.b16 %v327, %v326
    %v342 = vpack.c.b16 %v329, %v328
    %v343 = vpack.c.b16 %v331, %v330
    %v344 = vpack.c.b16 %v333, %v332
    %v345 = vpack.c.b16 %v335, %v334
    %v346 = vpack.c.b16 %v337, %v336
    %v347 = vpack.c.b16 %v339, %v338
    %356 = vmatprep.subr.bf16.mxu0 0
    %357 = vmatpush1.bf16.msra.mxu0 %v340
    %358 = vmatprep.subr.bf16.mxu0 0
    %359 = vmatpush1.bf16.msra.mxu0 %v341
    %360 = vmatprep.subr.bf16.mxu0 0
    %361 = vmatpush1.bf16.msra.mxu0 %v342
    %362 = vmatprep.subr.bf16.mxu0 0
    %363 = vmatpush1.bf16.msra.mxu0 %v343
    %364 = vmatprep.subr.bf16.mxu0 0
    %365 = vmatpush1.bf16.msra.mxu0 %v344
    %366 = vmatprep.subr.bf16.mxu0 0
    %367 = vmatpush1.bf16.msra.mxu0 %v345
    %368 = vmatprep.subr.bf16.mxu0 0
    %369 = vmatpush1.bf16.msra.mxu0 %v346
    %370 = vmatprep.subr.bf16.mxu0 0
    %371 = vmatpush1.bf16.msra.mxu0 %v347
    %372 = vmatprep.subr.bf16.mxu0 0
    %373 = vmatpush1.bf16.msra.mxu0 0
    %374 = vmatprep.subr.bf16.mxu0 0
    %375 = vmatpush1.bf16.msra.mxu0 0
    %376 = vmatprep.subr.bf16.mxu0 0
    %377 = vmatpush1.bf16.msra.mxu0 0
    %378 = vmatprep.subr.bf16.mxu0 0
    %379 = vmatpush1.bf16.msra.mxu0 0
    %380 = vmatprep.subr.bf16.mxu0 0
    %381 = vmatpush1.bf16.msra.mxu0 0
    %382 = vmatprep.subr.bf16.mxu0 0
    %383 = vmatpush1.bf16.msra.mxu0 0
    %384 = vmatprep.subr.bf16.mxu0 0
    %385 = vmatpush1.bf16.msra.mxu0 0
    %386 = vmatprep.subr.bf16.mxu0 0
    %387 = vmatpush1.bf16.msra.mxu0 0
    %388 = vmatprep.mubr.bf16.mxu0 0
    %389 = vmatmul.mubr.bf16.gmra.mrb[0].mxu0 %v212
    %v390 = vpop.f32.mrb[0].mxu0
    %v391 = vadd.f32 0.0, %v390
    %v392 = vpop.f32.mrb[0].mxu0
    %v393 = vpop.f32.mrb[0].mxu0
    %v394 = vadd.f32 0.0, %v393
    %v395 = vpop.f32.mrb[0].mxu0
    %396 = vmatprep.mubr.bf16.mxu0 0
    %397 = vmatmul.mubr.bf16.gmra.mrb[0].mxu0 %v213
    %v398 = vpop.f32.mrb[0].mxu0
    %v399 = vadd.f32 0.0, %v398
    %v400 = vpop.f32.mrb[0].mxu0
    %v401 = vpop.f32.mrb[0].mxu0
    %v402 = vadd.f32 0.0, %v401
    %v403 = vpop.f32.mrb[0].mxu0
    %404 = vmatprep.mubr.bf16.mxu0 0
    %405 = vmatmul.mubr.bf16.gmra.mrb[0].mxu0 %v214
    %v406 = vpop.f32.mrb[0].mxu0
    %v407 = vadd.f32 0.0, %v406
    %v408 = vpop.f32.mrb[0].mxu0
    %v409 = vpop.f32.mrb[0].mxu0
    %v410 = vadd.f32 0.0, %v409
    %v411 = vpop.f32.mrb[0].mxu0
    %412 = vmatprep.mubr.bf16.mxu0 0
    %413 = vmatmul.mubr.bf16.gmra.mrb[0].mxu0 %v215
    %v414 = vpop.f32.mrb[0].mxu0
    %v415 = vadd.f32 0.0, %v414
    %v416 = vpop.f32.mrb[0].mxu0
    %v417 = vpop.f32.mrb[0].mxu0
    %v418 = vadd.f32 0.0, %v417
    %v419 = vpop.f32.mrb[0].mxu0
    %420 = vmatprep.mubr.bf16.mxu0 0
    %421 = vmatmul.mubr.bf16.gmra.mrb[0].mxu0 %v216
    %v422 = vpop.f32.mrb[0].mxu0
    %v423 = vadd.f32 0.0, %v422
    %v424 = vpop.f32.mrb[0].mxu0
    %v425 = vpop.f32.mrb[0].mxu0
    %v426 = vadd.f32 0.0, %v425
    %v427 = vpop.f32.mrb[0].mxu0
    %428 = vmatprep.mubr.bf16.mxu0 0
    %429 = vmatmul.mubr.bf16.gmra.mrb[0].mxu0 %v217
    %v430 = vpop.f32.mrb[0].mxu0
    %v431 = vadd.f32 0.0, %v430
    %v432 = vpop.f32.mrb[0].mxu0
    %v433 = vpop.f32.mrb[0].mxu0
    %v434 = vadd.f32 0.0, %v433
    %v435 = vpop.f32.mrb[0].mxu0
    %436 = vmatprep.mubr.bf16.mxu0 0
    %437 = vmatmul.mubr.bf16.gmra.mrb[0].mxu0 %v218
    %v438 = vpop.f32.mrb[0].mxu0
    %v439 = vadd.f32 0.0, %v438
    %v440 = vpop.f32.mrb[0].mxu0
    %v441 = vpop.f32.mrb[0].mxu0
    %v442 = vadd.f32 0.0, %v441
    %v443 = vpop.f32.mrb[0].mxu0
    %444 = vmatprep.mubr.bf16.mxu0 0
    %445 = vmatmul.mubr.bf16.gmra.mrb[0].mxu0 %v219
    %v446 = vpop.f32.mrb[0].mxu0
    %v447 = vadd.f32 0.0, %v446
    %v448 = vpop.f32.mrb[0].mxu0
    %v449 = vpop.f32.mrb[0].mxu0
    %v450 = vadd.f32 0.0, %v449
    %v451 = vpop.f32.mrb[0].mxu0
    %452 = vdwg.mxu0
    %vm453 = vcmask 64512
    %454 = vst.msk [vmem:[%s4] sm:$0xff] %vm453, %v391
    %455 = vst.msk [vmem:[%s4 + $0x8] sm:$0xff] %vm453, %v394
    %456 = vst.msk [vmem:[%s4 + $0x10] sm:$0xff] %vm453, %v399
    %457 = vst.msk [vmem:[%s4 + $0x18] sm:$0xff] %vm453, %v402
    %458 = vst.msk [vmem:[%s4 + $0x20] sm:$0xff] %vm453, %v407
    %459 = vst.msk [vmem:[%s4 + $0x28] sm:$0xff] %vm453, %v410
    %460 = vst.msk [vmem:[%s4 + $0x30] sm:$0xff] %vm453, %v415
    %461 = vst.msk [vmem:[%s4 + $0x38] sm:$0xff] %vm453, %v418
    %462 = vst.msk [vmem:[%s4 + $0x40] sm:$0xff] %vm453, %v423
    %463 = vst.msk [vmem:[%s4 + $0x48] sm:$0xff] %vm453, %v426
    %464 = vst.msk [vmem:[%s4 + $0x50] sm:$0xff] %vm453, %v431
    %465 = vst.msk [vmem:[%s4 + $0x58] sm:$0xff] %vm453, %v434
    %466 = vst.msk [vmem:[%s4 + $0x60] sm:$0xff] %vm453, %v439
    %467 = vst.msk [vmem:[%s4 + $0x68] sm:$0xff] %vm453, %v442
    %468 = vst.msk [vmem:[%s4 + $0x70] sm:$0xff] %vm453, %v447
    %469 = vst.msk [vmem:[%s4 + $0x78] sm:$0xff] %vm453, %v450
    // Predicated region
    $region14: #{tpu_custom_call.1} parent=1 // pred_check
      _
    $region15: #{tpu_custom_call.1} parent=1 // pred_check_branch
      %471 = sbr.rel (0) target = $region17
    $region16: #{tpu_custom_call.1} parent=1 // pred_region
      %s473 = ssub.s32 1024, 1024
      %474 = vsyncadd [#allocation3], %s473
      %s475 = sshll.u32 [#allocation2], 4
      %s476 = int_to_ptr.vmem [resolvable:$true] %s475
      %481 = dma.vmem_to_hbm [thread:$0]  %s476, 1024, %s3, [#allocation3], 64, 64, 4
    $region17: #{tpu_custom_call.1} parent=1 // pred_fallthru
      _
    // Predicated region
    $region18: #{tpu_custom_call.1} parent=1 // pred_check
      _
    $region19: #{tpu_custom_call.1} parent=1 // pred_check_branch
      %483 = sbr.rel (0) target = $region21
    $region20: #{tpu_custom_call.1} parent=1 // pred_region
      _
    $region21: #{tpu_custom_call.1} parent=1 // pred_fallthru
      _
    // Predicated region
    $region22: #{tpu_custom_call.1} parent=1 // pred_check
      _
    $region23: #{tpu_custom_call.1} parent=1 // pred_check_branch
      %485 = sbr.rel (0) target = $region25
    $region24: #{tpu_custom_call.1} parent=1 // pred_region
      %486 = dma.done [#allocation3], 1024
    $region25: #{tpu_custom_call.1} parent=1 // pred_fallthru
      _
    // Predicated region
    $region26: #{tpu_custom_call.1} parent=1 // pred_check
      _
    $region27: #{tpu_custom_call.1} parent=1 // pred_check_branch
      %488 = sbr.rel (0) target = $region29
    $region28: #{tpu_custom_call.1} parent=1 // pred_region
      _
    $region29: #{tpu_custom_call.1} parent=1 // pred_fallthru
      _
    %489 = vsyncpa [#allocation3], 1

</llo_original>
